<compile_context>
chip_gen: v7x
topology: tpu7x:2x2x1
jax: 0.10.0
libtpu: 0.0.40
codegen_flags: <defaults>
</compile_context>

<pallas_src>
import jax
import jax.numpy as jnp
from jax.experimental import pallas as pl
from jax.experimental.pallas import tpu as pltpu


def _spatial_matmul_kernel(x_ref, w_ref, b_ref, o_ref):
    # x_ref: (C, TL)  lane-dense slab of the collapsed (C, N*L) input
    # w_ref: (K, C)   full weight (grid-invariant, VMEM-resident)
    # b_ref: (K, 1)   full bias   (grid-invariant, VMEM-resident)
    # o_ref: (K, TL)  lane-dense output slab
    y = jnp.dot(w_ref[...], x_ref[...], preferred_element_type=jnp.float32)
    y = y + b_ref[...]                      # bias broadcasts along lanes
    o_ref[...] = y.astype(o_ref.dtype)


def spatial_layer(x, weight, bias, *, tile_lanes=2048):
    """Conv1d(kernel_size=1): x (N, C, L), weight (K, C), bias (K,) -> (N, K, L)."""
    N, C, L = x.shape
    K = weight.shape[0]
    dtype = x.dtype
    itemsize = jnp.dtype(dtype).itemsize

    # ---- layout plumbing (wrapper side): (N, C, L) -> (C, N*L) lane-dense ----
    NL = N * L
    x2 = jnp.transpose(x, (1, 0, 2)).reshape(C, NL)

    # Lane tile: multiple of 128, no larger than the (128-rounded) problem, and
    # sized so the double-buffered (C + K)-row slabs stay well under the scoped
    # VMEM default on every generation (v7x: 64 MiB physical / 32 MiB scoped).
    nl_128 = pl.cdiv(NL, 128) * 128
    vmem_budget = 8 * 1024 * 1024                        # conservative: fits v5e/v6e/v7x
    max_tl = max(128, (vmem_budget // (2 * (C + K) * itemsize)) // 128 * 128)
    tl = max(128, min(tile_lanes, nl_128, max_tl))

    nl_pad = pl.cdiv(NL, tl) * tl
    if nl_pad != NL:
        x2 = jnp.pad(x2, ((0, 0), (0, nl_pad - NL)))     # zero-pad collapsed axis

    bias2d = bias.reshape(K, 1)
    grid = (nl_pad // tl,)

    cost = pl.CostEstimate(
        flops=2 * K * C * nl_pad,
        transcendentals=0,
        bytes_accessed=(C * nl_pad + K * nl_pad) * itemsize + (K * C + K) * itemsize,
    )

    y2 = pl.pallas_call(
        _spatial_matmul_kernel,
        out_shape=jax.ShapeDtypeStruct((K, nl_pad), dtype),
        grid_spec=pltpu.PrefetchScalarGridSpec(
            num_scalar_prefetch=0,
            grid=grid,
            in_specs=[
                pl.BlockSpec((C, tl), lambda j: (0, j)),   # x slab (lane-tiled)
                pl.BlockSpec((K, C), lambda j: (0, 0)),    # weight (full, resident)
                pl.BlockSpec((K, 1), lambda j: (0, 0)),    # bias   (full, resident)
            ],
            out_specs=pl.BlockSpec((K, tl), lambda j: (0, j)),
        ),
        compiler_params=pltpu.CompilerParams(
            dimension_semantics=("parallel",),             # megacore sharding on v7x
        ),
        cost_estimate=cost,
    )(x2, weight, bias2d)

    # ---- back to PyTorch NCL order: (K, N*L) -> (N, K, L) ----
    y = y2[:, :NL].reshape(K, N, L).transpose(1, 0, 2)
    return y


if __name__ == "__main__":
    # SpatialLayer(in_channels=4, n_kernels=8) on a batch of 2, length-16 series.
    N, C_in, L, K = 2, 4, 16, 8

    key = jax.random.PRNGKey(0)
    kx, kw, kb = jax.random.split(key, 3)

    x = jax.random.normal(kx, (N, C_in, L), dtype=jnp.float32)
    # Deterministic parameter init (mimics Conv1d's uniform(-1/sqrt(C_in), 1/sqrt(C_in)))
    bound = 1.0 / jnp.sqrt(jnp.float32(C_in))
    weight = jax.random.uniform(kw, (K, C_in), minval=-bound, maxval=bound,
                                dtype=jnp.float32)
    bias = jax.random.uniform(kb, (K,), minval=-bound, maxval=bound,
                              dtype=jnp.float32)

    y = spatial_layer(x, weight, bias)
    jax.block_until_ready(y)

    # Reference check against plain-JAX einsum (= Conv1d with kernel_size=1)
    y_ref = jnp.einsum("kc,ncl->nkl", weight, x) + bias[None, :, None]
    assert y.shape == (N, K, L)
    assert jnp.allclose(y, y_ref, atol=1e-5), "mismatch vs reference"

    print("KERNEL_OK")
</pallas_src>

<mosaic_0001>
module attributes {stable_mosaic.version = 11 : i64} {
  func.func @_spatial_matmul_kernel(%arg0: i32, %arg1: memref<4x128xf32, #tpu.memory_space<vmem>>, %arg2: memref<8x4xf32, #tpu.memory_space<vmem>>, %arg3: memref<8x1xf32, #tpu.memory_space<vmem>>, %arg4: memref<8x128xf32, #tpu.memory_space<vmem>>) attributes {dimension_semantics = [#tpu.dimension_semantics<parallel>], iteration_bounds = array<i64: 1>, scalar_prefetch = 0 : i64, scratch_operands = 0 : i64, tpu.core_type = #tpu.core_type<tc>, window_params = [{transform_indices = @transform_0, window_bounds = array<i64: 4, 128>}, {pipeline_mode = #tpu.pipeline_mode<synchronous>, transform_indices = @transform_1, window_bounds = array<i64: 8, 4>}, {pipeline_mode = #tpu.pipeline_mode<synchronous>, transform_indices = @transform_2, window_bounds = array<i64: 8, 1>}, {transform_indices = @transform_3, window_bounds = array<i64: 8, 128>}]} {
    %c0 = arith.constant 0 : index
    %c0_0 = arith.constant 0 : index
    %0 = vector.load %arg2[%c0, %c0_0] : memref<8x4xf32, #tpu.memory_space<vmem>>, vector<8x4xf32>
    %c0_1 = arith.constant 0 : index
    %c0_2 = arith.constant 0 : index
    %1 = vector.load %arg1[%c0_1, %c0_2] : memref<4x128xf32, #tpu.memory_space<vmem>>, vector<4x128xf32>
    %cst = arith.constant dense<0.000000e+00> : vector<8x128xf32>
    %2 = tpu.matmul %0, %1, %cst {dimension_numbers = #tpu.dot_dimension_numbers<[1], [0], [0], [1], [0, 0, 1, 1], [], []>} : vector<8x4xf32>, vector<4x128xf32>, vector<8x128xf32> -> vector<8x128xf32>
    %c0_3 = arith.constant 0 : index
    %c0_4 = arith.constant 0 : index
    %3 = vector.load %arg3[%c0_3, %c0_4] : memref<8x1xf32, #tpu.memory_space<vmem>>, vector<8x1xf32>
    %4 = vector.broadcast %3 : vector<8x1xf32> to vector<8x128xf32>
    %5 = arith.addf %2, %4 : vector<8x128xf32>
    %c0_5 = arith.constant 0 : index
    %c0_6 = arith.constant 0 : index
    %6 = vector.load %arg4[%c0_5, %c0_6] : memref<8x128xf32, #tpu.memory_space<vmem>>, vector<8x128xf32>
    tpu.vector_store %arg4[%c0_5, %c0_6], %5 {strides = array<i32>} : memref<8x128xf32, #tpu.memory_space<vmem>>, vector<8x128xf32>,
    return
  }
  func.func @transform_0(%arg0: i32) -> (i32, i32) {
    %c0_i32 = arith.constant 0 : i32
    %c0_i32_0 = arith.constant 0 : i32
    return %c0_i32, %arg0 : i32, i32
  }
  func.func @transform_1(%arg0: i32) -> (i32, i32) {
    %c0_i32 = arith.constant 0 : i32
    %c0_i32_0 = arith.constant 0 : i32
    %c0_i32_1 = arith.constant 0 : i32
    return %c0_i32, %c0_i32_0 : i32, i32
  }
  func.func @transform_2(%arg0: i32) -> (i32, i32) {
    %c0_i32 = arith.constant 0 : i32
    %c0_i32_0 = arith.constant 0 : i32
    %c0_i32_1 = arith.constant 0 : i32
    return %c0_i32, %c0_i32_0 : i32, i32
  }
  func.func @transform_3(%arg0: i32) -> (i32, i32) {
    %c0_i32 = arith.constant 0 : i32
    %c0_i32_0 = arith.constant 0 : i32
    return %c0_i32, %arg0 : i32, i32
  }
}

</mosaic_0001>

<llo_original>
// kernel: tpu_custom_call.1
$region0: #{tpu_custom_call.1}
  #allocation0 [shape = 'u32[]', space=smem, size = 0x4, offset = 0x4, fixed_abs, tag = 'smem constant byte address 0x4 - core index']
  #allocation1 [shape = 'u32[144,128]{1,0:T(1,128)}', space=vmem, size = 0x12000, scoped, tag = 'internal scratch']
  %s0 = inlined_call_operand.vmem [shape: f32[4,128], index: 0, kind: input, shape index: {}]
  %s1 = inlined_call_operand.vmem [shape: f32[8,4], index: 1, kind: input, shape index: {}]
  %s2 = inlined_call_operand.vmem [shape: f32[8,1], index: 2, kind: input, shape index: {}]
  %s3 = inlined_call_operand.hbm [shape: f32[8,128], index: 3, kind: output, shape index: {}]
  %s4 = sld [smem:[#allocation0]]
  $region22: #{tpu_custom_call.1} parent=0
    _
  %s6 = ssub.s32 1, %s4
  %s7 = scalar_select 0, %s6, %s4
  $region1: #{tpu_custom_call.1} parent=0
    #allocation2 [shape = 'u8[4096]{0}', space=vmem, size = 0x1000, scoped, tag = 'output window, operand 0, single buffered']
    #allocation3 [shape = 's32[1]{0}', space=sflag, size = 0x4, scoped, tag = 'scoped memory for tpu_custom_call.1']
    %8 = vsyncpa [#allocation3], 0
    // Predicated region
    $region2: #{tpu_custom_call.1} parent=1 // pred_check
      _
    $region3: #{tpu_custom_call.1} parent=1 // pred_check_branch
      %10 = sbr.rel (0) target = $region5
    $region4: #{tpu_custom_call.1} parent=1 // pred_region
      _
    $region5: #{tpu_custom_call.1} parent=1 // pred_fallthru
      _
    // Predicated region
    $region6: #{tpu_custom_call.1} parent=1 // pred_check
      _
    $region7: #{tpu_custom_call.1} parent=1 // pred_check_branch
      %12 = sbr.rel (0) target = $region9
    $region8: #{tpu_custom_call.1} parent=1 // pred_region
      _
    $region9: #{tpu_custom_call.1} parent=1 // pred_fallthru
      _
    // Predicated region
    $region10: #{tpu_custom_call.1} parent=1 // pred_check
      _
    $region11: #{tpu_custom_call.1} parent=1 // pred_check_branch
      %14 = sbr.rel (0) target = $region13
    $region12: #{tpu_custom_call.1} parent=1 // pred_region
      _
    $region13: #{tpu_custom_call.1} parent=1 // pred_fallthru
      _
    %v15 = vld [vmem:[%s1] sm:$0xff]
    %v16 = vld [vmem:[%s0] sm:$0xf]
    %v17 = vld [vmem:[%s2] sm:$0xff]
    %19 = vset.pattern.permute.xlu0 0
    %20 = vperm.xlu0 %19, %v17
    %v21 = vpop.permute.xlu0 %20
    %vm23 = vcmask 31744
    %v25 = vsel %vm23, %v15, 0
    %vm27 = vcmask 1043456
    %v29 = vsel %vm27, %v16, 0
    %31 = vmatprep.subr.mxu0 0.0
    %32 = vmatpush1.msra.mxu0 %v29
    %33 = vmatprep.subr.mxu0 0.0
    %34 = vmatpush1.msra.mxu0 0.0
    %35 = vmatprep.subr.mxu0 0.0
    %36 = vmatpush1.msra.mxu0 0.0
    %37 = vmatprep.subr.mxu0 0.0
    %38 = vmatpush1.msra.mxu0 0.0
    %39 = vmatprep.subr.mxu0 0.0
    %40 = vmatpush1.msra.mxu0 0.0
    %41 = vmatprep.subr.mxu0 0.0
    %42 = vmatpush1.msra.mxu0 0.0
    %43 = vmatprep.subr.mxu0 0.0
    %44 = vmatpush1.msra.mxu0 0.0
    %45 = vmatprep.subr.mxu0 0.0
    %46 = vmatpush1.msra.mxu0 0.0
    %47 = vmatprep.subr.mxu0 0.0
    %48 = vmatpush1.msra.mxu0 0.0
    %49 = vmatprep.subr.mxu0 0.0
    %50 = vmatpush1.msra.mxu0 0.0
    %51 = vmatprep.subr.mxu0 0.0
    %52 = vmatpush1.msra.mxu0 0.0
    %53 = vmatprep.subr.mxu0 0.0
    %54 = vmatpush1.msra.mxu0 0.0
    %55 = vmatprep.subr.mxu0 0.0
    %56 = vmatpush1.msra.mxu0 0.0
    %57 = vmatprep.subr.mxu0 0.0
    %58 = vmatpush1.msra.mxu0 0.0
    %59 = vmatprep.subr.mxu0 0.0
    %60 = vmatpush1.msra.mxu0 0.0
    %61 = vmatprep.subr.mxu0 0.0
    %62 = vmatpush1.msra.mxu0 0.0
    %63 = vmatprep.subr.mxu0 0.0
    %64 = vmatpush1.msra.mxu0 0.0
    %65 = vmatprep.subr.mxu0 0.0
    %66 = vmatpush1.msra.mxu0 0.0
    %67 = vmatprep.subr.mxu0 0.0
    %68 = vmatpush1.msra.mxu0 0.0
    %69 = vmatprep.subr.mxu0 0.0
    %70 = vmatpush1.msra.mxu0 0.0
    %71 = vmatprep.subr.mxu0 0.0
    %72 = vmatpush1.msra.mxu0 0.0
    %73 = vmatprep.subr.mxu0 0.0
    %74 = vmatpush1.msra.mxu0 0.0
    %75 = vmatprep.subr.mxu0 0.0
    %76 = vmatpush1.msra.mxu0 0.0
    %77 = vmatprep.subr.mxu0 0.0
    %78 = vmatpush1.msra.mxu0 0.0
    %79 = vmatprep.subr.mxu0 0.0
    %80 = vmatpush1.msra.mxu0 0.0
    %81 = vmatprep.subr.mxu0 0.0
    %82 = vmatpush1.msra.mxu0 0.0
    %83 = vmatprep.subr.mxu0 0.0
    %84 = vmatpush1.msra.mxu0 0.0
    %85 = vmatprep.subr.mxu0 0.0
    %86 = vmatpush1.msra.mxu0 0.0
    %87 = vmatprep.subr.mxu0 0.0
    %88 = vmatpush1.msra.mxu0 0.0
    %89 = vmatprep.subr.mxu0 0.0
    %90 = vmatpush1.msra.mxu0 0.0
    %91 = vmatprep.subr.mxu0 0.0
    %92 = vmatpush1.msra.mxu0 0.0
    %93 = vmatprep.subr.mxu0 0.0
    %94 = vmatpush1.msra.mxu0 0.0
    %95 = vmatprep.mubr.f32.mxu0 0.0
    %96 = vmatmul.mubr.f32.gmra.mrb[0].mxu0 %v25
    %v97 = vpop.f32.mrb[0].mxu0
    %v98 = vadd.f32 %v21, %v97
    %v99 = vpop.f32.mrb[0].mxu0
    %100 = vdwg.mxu0
    %101 = vst [vmem:[#allocation2] sm:$0xff] %v98
    // Predicated region
    $region14: #{tpu_custom_call.1} parent=1 // pred_check
      _
    $region15: #{tpu_custom_call.1} parent=1 // pred_check_branch
      %103 = sbr.rel (0) target = $region17
    $region16: #{tpu_custom_call.1} parent=1 // pred_region
      %s105 = ssub.s32 128, 128
      %106 = vsyncadd [#allocation3], %s105
      %s108 = sshll.u32 [#allocation2], 4
      %s109 = int_to_ptr.vmem [resolvable:$true] %s108
      %111 = dma.vmem_to_hbm [thread:$0]  %s109, 128, %s3, [#allocation3]
    $region17: #{tpu_custom_call.1} parent=1 // pred_fallthru
      _
    // Predicated region
    $region18: #{tpu_custom_call.1} parent=1 // pred_check
      _
    $region19: #{tpu_custom_call.1} parent=1 // pred_check_branch
      %113 = sbr.rel (0) target = $region21
    $region20: #{tpu_custom_call.1} parent=1 // pred_region
      %114 = dma.done [#allocation3], 128
    $region21: #{tpu_custom_call.1} parent=1 // pred_fallthru
      _
    %115 = vsyncpa [#allocation3], 1

</llo_original>
